<compile_context>
chip_gen: v7x
topology: tpu7x:2x2x1
jax: 0.10.0
libtpu: 0.0.40
codegen_flags: <defaults>
</compile_context>

<pallas_src>
import math

import jax
import jax.numpy as jnp
from jax.experimental import pallas as pl
from jax.experimental.pallas import tpu as pltpu


def _round_up(x, m):
    return ((x + m - 1) // m) * m


def critic_kernel(xu_ref, w1_ref, b1_ref, w2_ref, b2_ref, w3_ref, b3_ref,
                  o_ref):
    # l1 + relu: single fused dot over the (zero-padded) concat dimension.
    # Input cast f32 -> bf16 happens here (VPU work hidden under the MXU).
    xu = xu_ref[...].astype(w1_ref.dtype)
    h1 = jnp.dot(xu, w1_ref[...], preferred_element_type=jnp.float32)
    h1 = jnp.maximum(h1 + b1_ref[...], 0.0)            # f32 epilogue

    # l2 + relu (bf16 operands, f32 accumulate)
    h2 = jnp.dot(h1.astype(w2_ref.dtype), w2_ref[...],
                 preferred_element_type=jnp.float32)
    h2 = jnp.maximum(h2 + b2_ref[...], 0.0)

    # l3 has N=1: VPU multiply + lane reduction instead of an MXU pass.
    q = jnp.sum(h2 * w3_ref[...], axis=1, keepdims=True) + b3_ref[...]

    # Narrow (bm, 1) store: only 4 B/row of HBM writeback.
    o_ref[...] = q.astype(o_ref.dtype)


def prepare_critic_params(params, state_dim, action_dim):
    """One-time conversion of PyTorch-layout params into kernel layout.

    Hoisted out of the forward so casts/pads/transposes do not re-run every
    step under jit in a training loop.
    """
    w1, b1, w2, b2, w3, b3 = params
    k = state_dim + action_dim
    k_pad = _round_up(k, 16)                    # bf16 sublane pack
    w1p = jnp.pad(w1, ((0, k_pad - k), (0, 0))).astype(jnp.bfloat16)
    w2b = w2.astype(jnp.bfloat16)
    w3r = w3.T                                  # (1, hidden), f32 for VPU reduce
    return (w1p, b1, w2b, b2, w3r, b3)


def critic_forward(x, u, prepared, *, block_m=256):
    """x: (B, state_dim) f32, u: (B, action_dim) f32 -> (B, 1) f32."""
    w1p, b1, w2b, b2, w3r, b3 = prepared
    B, state_dim = x.shape
    action_dim = u.shape[1]
    K = state_dim + action_dim
    K_pad = w1p.shape[0]

    # Batch tiling: pad B to the block size and grid over batch rows.
    if B >= block_m:
        bm = block_m
    else:
        bm = max(_round_up(B, 16), 16)          # bf16 packs 16 rows / vreg group
    B_pad = _round_up(B, bm)

    # Fuse concat + K/B padding in the wrapper (tiny: <= 32 lanes wide).
    xu = jnp.concatenate([x, u], axis=1)
    xu = jnp.pad(xu, ((0, B_pad - B), (0, K_pad - K)))

    const = lambda a: pl.BlockSpec(a.shape, lambda i: (0,) * a.ndim)

    out = pl.pallas_call(
        critic_kernel,
        out_shape=jax.ShapeDtypeStruct((B_pad, 1), jnp.float32),
        grid=(B_pad // bm,),
        in_specs=[
            pl.BlockSpec((bm, K_pad), lambda i: (i, 0)),
            const(w1p), const(b1),
            const(w2b), const(b2),
            const(w3r), const(b3),
        ],
        out_specs=pl.BlockSpec((bm, 1), lambda i: (i, 0)),
        compiler_params=pltpu.CompilerParams(
            dimension_semantics=("parallel",)),
    )(xu, w1p, b1, w2b, b2, w3r, b3)

    # Padded rows compute garbage Q values (relu(b1) propagated); slice them off.
    return out[:B]


def init_linear(key, in_features, out_features):
    """PyTorch nn.Linear default init (uniform(+-1/sqrt(fan_in)));
    weight returned as (in, out) so the kernel computes x @ W + b."""
    kw, kb = jax.random.split(key)
    bound = 1.0 / math.sqrt(in_features)
    w = jax.random.uniform(kw, (in_features, out_features), jnp.float32,
                           minval=-bound, maxval=bound)
    b = jax.random.uniform(kb, (1, out_features), jnp.float32,
                           minval=-bound, maxval=bound)
    return w, b


def make_critic_params(key, state_dim, action_dim, hidden=512):
    k1, k2, k3 = jax.random.split(key, 3)
    w1, b1 = init_linear(k1, state_dim + action_dim, hidden)
    w2, b2 = init_linear(k2, hidden, hidden)
    w3, b3 = init_linear(k3, hidden, 1)
    return (w1, b1, w2, b2, w3, b3)


if __name__ == "__main__":
    state_dim, action_dim, batch = 17, 6, 8

    key = jax.random.PRNGKey(0)
    k_params, k_x, k_u = jax.random.split(key, 3)

    params = make_critic_params(k_params, state_dim, action_dim)
    prepared = prepare_critic_params(params, state_dim, action_dim)
    x = jax.random.normal(k_x, (batch, state_dim), jnp.float32)
    u = jax.random.normal(k_u, (batch, action_dim), jnp.float32)

    q = critic_forward(x, u, prepared)
    q = jax.block_until_ready(q)
    assert q.shape == (batch, 1)

    w1, b1, w2, b2, w3, b3 = params

    # Reference 1: mirrors the kernel's numerics (bf16 operands, f32 accum).
    xu = jnp.concatenate([x, u], axis=1)
    h1 = jnp.dot(xu.astype(jnp.bfloat16), w1.astype(jnp.bfloat16),
                 preferred_element_type=jnp.float32)
    h1 = jnp.maximum(h1 + b1, 0.0)
    h2 = jnp.dot(h1.astype(jnp.bfloat16), w2.astype(jnp.bfloat16),
                 preferred_element_type=jnp.float32)
    h2 = jnp.maximum(h2 + b2, 0.0)
    ref_bf16 = jnp.sum(h2 * w3.T, axis=1, keepdims=True) + b3
    assert jnp.allclose(q, ref_bf16, atol=2e-3, rtol=2e-3), \
        f"max diff vs bf16 reference: {jnp.max(jnp.abs(q - ref_bf16))}"

    # Reference 2: original full-f32 PyTorch semantics (loose check, since the
    # kernel deliberately uses bf16 matmul operands).
    ref = jnp.maximum(xu @ w1 + b1, 0.0)
    ref = jnp.maximum(ref @ w2 + b2, 0.0)
    ref = ref @ w3 + b3
    assert jnp.allclose(q, ref, atol=5e-2, rtol=5e-2), \
        f"max diff vs f32 reference: {jnp.max(jnp.abs(q - ref))}"

    print("KERNEL_OK")
</pallas_src>

<mosaic_0001>
module attributes {stable_mosaic.version = 11 : i64} {
  func.func @critic_kernel(%arg0: i32, %arg1: memref<16x32xf32, #tpu.memory_space<vmem>>, %arg2: memref<32x512xbf16, #tpu.memory_space<vmem>>, %arg3: memref<1x512xf32, #tpu.memory_space<vmem>>, %arg4: memref<512x512xbf16, #tpu.memory_space<vmem>>, %arg5: memref<1x512xf32, #tpu.memory_space<vmem>>, %arg6: memref<1x512xf32, #tpu.memory_space<vmem>>, %arg7: memref<1x1xf32, #tpu.memory_space<vmem>>, %arg8: memref<16x1xf32, #tpu.memory_space<vmem>>) attributes {dimension_semantics = [#tpu.dimension_semantics<parallel>], iteration_bounds = array<i64: 1>, scalar_prefetch = 0 : i64, scratch_operands = 0 : i64, tpu.core_type = #tpu.core_type<tc>, window_params = [{transform_indices = @transform_0, window_bounds = array<i64: 16, 32>}, {pipeline_mode = #tpu.pipeline_mode<synchronous>, transform_indices = @transform_1, window_bounds = array<i64: 32, 512>}, {pipeline_mode = #tpu.pipeline_mode<synchronous>, transform_indices = @transform_2, window_bounds = array<i64: 1, 512>}, {pipeline_mode = #tpu.pipeline_mode<synchronous>, transform_indices = @transform_3, window_bounds = array<i64: 512, 512>}, {pipeline_mode = #tpu.pipeline_mode<synchronous>, transform_indices = @transform_4, window_bounds = array<i64: 1, 512>}, {pipeline_mode = #tpu.pipeline_mode<synchronous>, transform_indices = @transform_5, window_bounds = array<i64: 1, 512>}, {pipeline_mode = #tpu.pipeline_mode<synchronous>, transform_indices = @transform_6, window_bounds = array<i64: 1, 1>}, {transform_indices = @transform_7, window_bounds = array<i64: 16, 1>}]} {
    %c0 = arith.constant 0 : index
    %c0_0 = arith.constant 0 : index
    %0 = vector.load %arg1[%c0, %c0_0] : memref<16x32xf32, #tpu.memory_space<vmem>>, vector<16x32xf32>
    %1 = arith.truncf %0 : vector<16x32xf32> to vector<16x32xbf16>
    %c0_1 = arith.constant 0 : index
    %c0_2 = arith.constant 0 : index
    %2 = vector.load %arg2[%c0_1, %c0_2] : memref<32x512xbf16, #tpu.memory_space<vmem>>, vector<32x512xbf16>
    %cst = arith.constant dense<0.000000e+00> : vector<16x512xf32>
    %3 = tpu.matmul %1, %2, %cst {dimension_numbers = #tpu.dot_dimension_numbers<[1], [0], [0], [1], [0, 0, 1, 1], [], []>} : vector<16x32xbf16>, vector<32x512xbf16>, vector<16x512xf32> -> vector<16x512xf32>
    %c0_3 = arith.constant 0 : index
    %c0_4 = arith.constant 0 : index
    %4 = vector.load %arg3[%c0_3, %c0_4] : memref<1x512xf32, #tpu.memory_space<vmem>>, vector<1x512xf32>
    %5 = vector.broadcast %4 : vector<1x512xf32> to vector<16x512xf32>
    %6 = arith.addf %3, %5 : vector<16x512xf32>
    %cst_5 = arith.constant 0.000000e+00 : f32
    %7 = vector.broadcast %cst_5 : f32 to vector<16x512xf32>
    %8 = arith.maximumf %6, %7 : vector<16x512xf32>
    %9 = arith.truncf %8 : vector<16x512xf32> to vector<16x512xbf16>
    %c0_6 = arith.constant 0 : index
    %c0_7 = arith.constant 0 : index
    %10 = vector.load %arg4[%c0_6, %c0_7] : memref<512x512xbf16, #tpu.memory_space<vmem>>, vector<512x512xbf16>
    %cst_8 = arith.constant dense<0.000000e+00> : vector<16x512xf32>
    %11 = tpu.matmul %9, %10, %cst_8 {dimension_numbers = #tpu.dot_dimension_numbers<[1], [0], [0], [1], [0, 0, 1, 1], [], []>} : vector<16x512xbf16>, vector<512x512xbf16>, vector<16x512xf32> -> vector<16x512xf32>
    %c0_9 = arith.constant 0 : index
    %c0_10 = arith.constant 0 : index
    %12 = vector.load %arg5[%c0_9, %c0_10] : memref<1x512xf32, #tpu.memory_space<vmem>>, vector<1x512xf32>
    %13 = vector.broadcast %12 : vector<1x512xf32> to vector<16x512xf32>
    %14 = arith.addf %11, %13 : vector<16x512xf32>
    %cst_11 = arith.constant 0.000000e+00 : f32
    %15 = vector.broadcast %cst_11 : f32 to vector<16x512xf32>
    %16 = arith.maximumf %14, %15 : vector<16x512xf32>
    %c0_12 = arith.constant 0 : index
    %c0_13 = arith.constant 0 : index
    %17 = vector.load %arg6[%c0_12, %c0_13] : memref<1x512xf32, #tpu.memory_space<vmem>>, vector<1x512xf32>
    %18 = vector.broadcast %17 : vector<1x512xf32> to vector<16x512xf32>
    %19 = arith.mulf %16, %18 : vector<16x512xf32>
    %cst_14 = arith.constant dense<0.000000e+00> : vector<16xf32>
    %20 = vector.multi_reduction <add>, %19, %cst_14 [1] : vector<16x512xf32> to vector<16xf32>
    %21 = vector.shape_cast %20 : vector<16xf32> to vector<16x1xf32>
    %c0_15 = arith.constant 0 : index
    %c0_16 = arith.constant 0 : index
    %22 = vector.load %arg7[%c0_15, %c0_16] : memref<1x1xf32, #tpu.memory_space<vmem>>, vector<1x1xf32>
    %23 = vector.broadcast %22 : vector<1x1xf32> to vector<16x1xf32>
    %24 = arith.addf %21, %23 : vector<16x1xf32>
    %c0_17 = arith.constant 0 : index
    %c0_18 = arith.constant 0 : index
    %25 = vector.load %arg8[%c0_17, %c0_18] : memref<16x1xf32, #tpu.memory_space<vmem>>, vector<16x1xf32>
    tpu.vector_store %arg8[%c0_17, %c0_18], %24 {strides = array<i32>} : memref<16x1xf32, #tpu.memory_space<vmem>>, vector<16x1xf32>,
    return
  }
  func.func @transform_0(%arg0: i32) -> (i32, i32) {
    %c0_i32 = arith.constant 0 : i32
    %c0_i32_0 = arith.constant 0 : i32
    return %arg0, %c0_i32 : i32, i32
  }
  func.func @transform_1(%arg0: i32) -> (i32, i32) {
    %c0_i32 = arith.constant 0 : i32
    %c0_i32_0 = arith.constant 0 : i32
    %c0_i32_1 = arith.constant 0 : i32
    return %c0_i32, %c0_i32_0 : i32, i32
  }
  func.func @transform_2(%arg0: i32) -> (i32, i32) {
    %c0_i32 = arith.constant 0 : i32
    %c0_i32_0 = arith.constant 0 : i32
    %c0_i32_1 = arith.constant 0 : i32
    return %c0_i32, %c0_i32_0 : i32, i32
  }
  func.func @transform_3(%arg0: i32) -> (i32, i32) {
    %c0_i32 = arith.constant 0 : i32
    %c0_i32_0 = arith.constant 0 : i32
    %c0_i32_1 = arith.constant 0 : i32
    return %c0_i32, %c0_i32_0 : i32, i32
  }
  func.func @transform_4(%arg0: i32) -> (i32, i32) {
    %c0_i32 = arith.constant 0 : i32
    %c0_i32_0 = arith.constant 0 : i32
    %c0_i32_1 = arith.constant 0 : i32
    return %c0_i32, %c0_i32_0 : i32, i32
  }
  func.func @transform_5(%arg0: i32) -> (i32, i32) {
    %c0_i32 = arith.constant 0 : i32
    %c0_i32_0 = arith.constant 0 : i32
    %c0_i32_1 = arith.constant 0 : i32
    return %c0_i32, %c0_i32_0 : i32, i32
  }
  func.func @transform_6(%arg0: i32) -> (i32, i32) {
    %c0_i32 = arith.constant 0 : i32
    %c0_i32_0 = arith.constant 0 : i32
    %c0_i32_1 = arith.constant 0 : i32
    return %c0_i32, %c0_i32_0 : i32, i32
  }
  func.func @transform_7(%arg0: i32) -> (i32, i32) {
    %c0_i32 = arith.constant 0 : i32
    %c0_i32_0 = arith.constant 0 : i32
    return %arg0, %c0_i32 : i32, i32
  }
}

</mosaic_0001>

<llo_original>
// kernel: tpu_custom_call.1
$region0: #{tpu_custom_call.1}
  #allocation0 [shape = 'u32[]', space=smem, size = 0x4, offset = 0x4, fixed_abs, tag = 'smem constant byte address 0x4 - core index']
  #allocation1 [shape = 'u32[144,128]{1,0:T(1,128)}', space=vmem, size = 0x12000, scoped, tag = 'internal scratch']
  #allocation2 [shape = 'f32[1,1]{1,0:T(1,128)S(1)}', space=vmem, size = 0x200, scoped, tag = 'scoped memory for tpu_custom_call.1']
  %s0 = inlined_call_operand.hbm [shape: f32[16,32], index: 0, kind: input, shape index: {}]
  %s1 = inlined_call_operand.hbm [shape: bf16[32,512], index: 1, kind: input, shape index: {}]
  %s2 = inlined_call_operand.vmem [shape: f32[1,512], index: 2, kind: input, shape index: {}]
  %s3 = inlined_call_operand.hbm [shape: bf16[512,512], index: 3, kind: input, shape index: {}]
  %s4 = inlined_call_operand.vmem [shape: f32[1,512], index: 4, kind: input, shape index: {}]
  %s5 = inlined_call_operand.vmem [shape: f32[1,512], index: 5, kind: input, shape index: {}]
  %s6 = inlined_call_operand.<no memory space> [shape: f32[1,1], index: 6, kind: input, shape index: {}]
  %s7 = inlined_call_operand.vmem [shape: f32[16,1], index: 7, kind: output, shape index: {}]
  %s8 = sld [smem:[#allocation0]]
  $region50: #{tpu_custom_call.1} parent=0
    _
  %s10 = ssub.s32 1, %s8
  %s11 = scalar_select 0, %s10, %s8
  %v12 = vstv %s6
  %13 = vst [vmem:[#allocation2] sm:$0x1] %v12
  $region1: #{tpu_custom_call.1} parent=0
    #allocation3 [shape = 'u8[8192]{0}', space=vmem, size = 0x2000, scoped, tag = 'input window, operand 0, single buffered']
    #allocation4 [shape = 's32[1]{0}', space=sflag, size = 0x4, scoped, tag = 'scoped memory for tpu_custom_call.1']
    #allocation5 [shape = 'u8[32768]{0}', space=vmem, size = 0x8000, scoped, tag = 'input window, operand 1, single buffered']
    #allocation6 [shape = 's32[1]{0}', space=sflag, size = 0x4, scoped, tag = 'scoped memory for tpu_custom_call.1']
    #allocation7 [shape = 'u8[524288]{0}', space=vmem, size = 0x80000, scoped, tag = 'input window, operand 3, single buffered']
    %14 = vsyncpa [#allocation4], 0
    %15 = vsyncpa [#allocation6], 0
    // Predicated region
    $region2: #{tpu_custom_call.1} parent=1 // pred_check
      _
    $region3: #{tpu_custom_call.1} parent=1 // pred_check_branch
      %17 = sbr.rel (0) target = $region5
    $region4: #{tpu_custom_call.1} parent=1 // pred_region
      %s19 = ssub.s32 256, 256
      %20 = vsyncadd [#allocation4], %s19
      %s21 = sshll.u32 [#allocation3], 4
      %s22 = int_to_ptr.vmem [resolvable:$true] %s21
      %27 = dma.hbm_to_vmem [thread:$0]  %s0, 256, %s22, [#allocation4], 128, 128, 8
    $region5: #{tpu_custom_call.1} parent=1 // pred_fallthru
      _
    // Predicated region
    $region6: #{tpu_custom_call.1} parent=1 // pred_check
      _
    $region7: #{tpu_custom_call.1} parent=1 // pred_check_branch
      %29 = sbr.rel (0) target = $region9
    $region8: #{tpu_custom_call.1} parent=1 // pred_region
      %s31 = ssub.s32 1024, 1024
      %32 = vsyncadd [#allocation6], %s31
      %s33 = sshll.u32 [#allocation5], 4
      %s34 = int_to_ptr.vmem [resolvable:$true] %s33
      %39 = dma.hbm_to_vmem [thread:$0]  %s1, 1024, %s34, [#allocation6], 256, 256, 16
    $region9: #{tpu_custom_call.1} parent=1 // pred_fallthru
      _
    // Predicated region
    $region10: #{tpu_custom_call.1} parent=1 // pred_check
      _
    $region11: #{tpu_custom_call.1} parent=1 // pred_check_branch
      %41 = sbr.rel (0) target = $region13
    $region12: #{tpu_custom_call.1} parent=1 // pred_region
      _
    $region13: #{tpu_custom_call.1} parent=1 // pred_fallthru
      _
    // Predicated region
    $region14: #{tpu_custom_call.1} parent=1 // pred_check
      _
    $region15: #{tpu_custom_call.1} parent=1 // pred_check_branch
      %43 = sbr.rel (0) target = $region17
    $region16: #{tpu_custom_call.1} parent=1 // pred_region
      %s45 = ssub.s32 16384, 16384
      %46 = vsyncadd [#allocation6], %s45
      %s47 = sshll.u32 [#allocation7], 4
      %s48 = int_to_ptr.vmem [resolvable:$true] %s47
      %53 = dma.hbm_to_vmem [thread:$0]  %s3, 16384, %s48, [#allocation6], 256, 256, 16
    $region17: #{tpu_custom_call.1} parent=1 // pred_fallthru
      _
    // Predicated region
    $region18: #{tpu_custom_call.1} parent=1 // pred_check
      _
    $region19: #{tpu_custom_call.1} parent=1 // pred_check_branch
      %55 = sbr.rel (0) target = $region21
    $region20: #{tpu_custom_call.1} parent=1 // pred_region
      _
    $region21: #{tpu_custom_call.1} parent=1 // pred_fallthru
      _
    // Predicated region
    $region22: #{tpu_custom_call.1} parent=1 // pred_check
      _
    $region23: #{tpu_custom_call.1} parent=1 // pred_check_branch
      %57 = sbr.rel (0) target = $region25
    $region24: #{tpu_custom_call.1} parent=1 // pred_region
      _
    $region25: #{tpu_custom_call.1} parent=1 // pred_fallthru
      _
    // Predicated region
    $region26: #{tpu_custom_call.1} parent=1 // pred_check
      _
    $region27: #{tpu_custom_call.1} parent=1 // pred_check_branch
      %59 = sbr.rel (0) target = $region29
    $region28: #{tpu_custom_call.1} parent=1 // pred_region
      _
    $region29: #{tpu_custom_call.1} parent=1 // pred_fallthru
      _
    // Predicated region
    $region30: #{tpu_custom_call.1} parent=1 // pred_check
      _
    $region31: #{tpu_custom_call.1} parent=1 // pred_check_branch
      %61 = sbr.rel (0) target = $region33
    $region32: #{tpu_custom_call.1} parent=1 // pred_region
      %62 = dma.done [#allocation4], 256
    $region33: #{tpu_custom_call.1} parent=1 // pred_fallthru
      _
    // Predicated region
    $region34: #{tpu_custom_call.1} parent=1 // pred_check
      _
    $region35: #{tpu_custom_call.1} parent=1 // pred_check_branch
      %64 = sbr.rel (0) target = $region37
    $region36: #{tpu_custom_call.1} parent=1 // pred_region
      %65 = dma.done [#allocation6], 1024
    $region37: #{tpu_custom_call.1} parent=1 // pred_fallthru
      _
    // Predicated region
    $region38: #{tpu_custom_call.1} parent=1 // pred_check
      _
    $region39: #{tpu_custom_call.1} parent=1 // pred_check_branch
      %67 = sbr.rel (0) target = $region41
    $region40: #{tpu_custom_call.1} parent=1 // pred_region
      %68 = dma.done [#allocation6], 16384
    $region41: #{tpu_custom_call.1} parent=1 // pred_fallthru
      _
    %v70 = vld [vmem:[#allocation3] sm:$0xff]
    %v71 = vld [vmem:[#allocation3 + $0x8] sm:$0xff]
    %v72 = vpack.c.bf16 %v71, %v70
    %v73 = vld [vmem:[#allocation5] sm:$0xff]
    %v74 = vld [vmem:[#allocation5 + $0x8] sm:$0xff]
    %v75 = vld [vmem:[#allocation5 + $0x10] sm:$0xff]
    %v76 = vld [vmem:[#allocation5 + $0x18] sm:$0xff]
    %v77 = vld [vmem:[#allocation5 + $0x20] sm:$0xff]
    %v78 = vld [vmem:[#allocation5 + $0x28] sm:$0xff]
    %v79 = vld [vmem:[#allocation5 + $0x30] sm:$0xff]
    %v80 = vld [vmem:[#allocation5 + $0x38] sm:$0xff]
    %v81 = vld [vmem:[%s2] sm:$0xf]
    %v83 = vlaneseq
    %v84 = vshrl.u32 %v83, 7
    %v85 = vsub.s32 0, %v84
    %v86 = vrot.slane %v81, %v85
    %v87 = vlaneseq
    %v88 = vshrl.u32 %v87, 7
    %v89 = vsub.s32 1, %v88
    %v90 = vrot.slane %v81, %v89
    %v91 = vlaneseq
    %v92 = vshrl.u32 %v91, 7
    %v93 = vsub.s32 2, %v92
    %v94 = vrot.slane %v81, %v93
    %v95 = vlaneseq
    %v96 = vshrl.u32 %v95, 7
    %v97 = vsub.s32 3, %v96
    %v98 = vrot.slane %v81, %v97
    %v111 = vunpack.c.l.b16 %v73
    %v112 = vunpack.c.h.b16 %v73
    %v113 = vunpack.c.l.b16 %v74
    %v114 = vunpack.c.h.b16 %v74
    %v115 = vunpack.c.l.b16 %v75
    %v116 = vunpack.c.h.b16 %v75
    %v117 = vunpack.c.l.b16 %v76
    %v118 = vunpack.c.h.b16 %v76
    %v119 = vunpack.c.l.b16 %v77
    %v120 = vunpack.c.h.b16 %v77
    %v121 = vunpack.c.l.b16 %v78
    %v122 = vunpack.c.h.b16 %v78
    %v123 = vunpack.c.l.b16 %v79
    %v124 = vunpack.c.h.b16 %v79
    %v125 = vunpack.c.l.b16 %v80
    %v126 = vunpack.c.h.b16 %v80
    %v127 = vpack.c.b16 %v115, %v111
    %v128 = vpack.c.b16 %v116, %v112
    %v129 = vpack.c.b16 %v117, %v113
    %v130 = vpack.c.b16 %v118, %v114
    %v131 = vpack.c.b16 %v123, %v119
    %v132 = vpack.c.b16 %v124, %v120
    %v133 = vpack.c.b16 %v125, %v121
    %v134 = vpack.c.b16 %v126, %v122
    %vm143 = vcmask 261120
    %v145 = vsel %vm143, %v72, 0
    %147 = vmatprep.subr.bf16.mxu0 %v128
    %148 = vmatpush1.bf16.msra.mxu0 %v127
    %149 = vmatprep.subr.bf16.mxu0 %v132
    %150 = vmatpush1.bf16.msra.mxu0 %v131
    %151 = vmatprep.subr.bf16.mxu0 0
    %152 = vmatpush1.bf16.msra.mxu0 0
    %153 = vmatprep.subr.bf16.mxu0 0
    %154 = vmatpush1.bf16.msra.mxu0 0
    %155 = vmatprep.subr.bf16.mxu0 0
    %156 = vmatpush1.bf16.msra.mxu0 0
    %157 = vmatprep.subr.bf16.mxu0 0
    %158 = vmatpush1.bf16.msra.mxu0 0
    %159 = vmatprep.subr.bf16.mxu0 0
    %160 = vmatpush1.bf16.msra.mxu0 0
    %161 = vmatprep.subr.bf16.mxu0 0
    %162 = vmatpush1.bf16.msra.mxu0 0
    %163 = vmatprep.subr.bf16.mxu0 0
    %164 = vmatpush1.bf16.msra.mxu0 0
    %165 = vmatprep.subr.bf16.mxu0 0
    %166 = vmatpush1.bf16.msra.mxu0 0
    %167 = vmatprep.subr.bf16.mxu0 0
    %168 = vmatpush1.bf16.msra.mxu0 0
    %169 = vmatprep.subr.bf16.mxu0 0
    %170 = vmatpush1.bf16.msra.mxu0 0
    %171 = vmatprep.subr.bf16.mxu0 0
    %172 = vmatpush1.bf16.msra.mxu0 0
    %173 = vmatprep.subr.bf16.mxu0 0
    %174 = vmatpush1.bf16.msra.mxu0 0
    %175 = vmatprep.subr.bf16.mxu0 0
    %176 = vmatpush1.bf16.msra.mxu0 0
    %177 = vmatprep.subr.bf16.mxu0 0
    %178 = vmatpush1.bf16.msra.mxu0 0
    %179 = vmatprep.mubr.bf16.mxu0 0
    %180 = vmatmul.mubr.bf16.gmra.mrb[0].mxu0 %v145
    %v181 = vpop.f32.mrb[0].mxu0
    %v182 = vadd.f32 %v86, %v181
    %v183 = vpop.f32.mrb[0].mxu0
    %v184 = vadd.f32 %v90, %v183
    %v185 = vpop.f32.mrb[0].mxu0
    %v186 = vadd.f32 %v86, %v185
    %v187 = vpop.f32.mrb[0].mxu0
    %v188 = vadd.f32 %v90, %v187
    %189 = vdwg.mxu0
    %190 = vmatprep.subr.bf16.mxu0 %v130
    %191 = vmatpush1.bf16.msra.mxu0 %v129
    %192 = vmatprep.subr.bf16.mxu0 %v134
    %193 = vmatpush1.bf16.msra.mxu0 %v133
    %194 = vmatprep.subr.bf16.mxu0 0
    %195 = vmatpush1.bf16.msra.mxu0 0
    %196 = vmatprep.subr.bf16.mxu0 0
    %197 = vmatpush1.bf16.msra.mxu0 0
    %198 = vmatprep.subr.bf16.mxu0 0
    %199 = vmatpush1.bf16.msra.mxu0 0
    %200 = vmatprep.subr.bf16.mxu0 0
    %201 = vmatpush1.bf16.msra.mxu0 0
    %202 = vmatprep.subr.bf16.mxu0 0
    %203 = vmatpush1.bf16.msra.mxu0 0
    %204 = vmatprep.subr.bf16.mxu0 0
    %205 = vmatpush1.bf16.msra.mxu0 0
    %206 = vmatprep.subr.bf16.mxu0 0
    %207 = vmatpush1.bf16.msra.mxu0 0
    %208 = vmatprep.subr.bf16.mxu0 0
    %209 = vmatpush1.bf16.msra.mxu0 0
    %210 = vmatprep.subr.bf16.mxu0 0
    %211 = vmatpush1.bf16.msra.mxu0 0
    %212 = vmatprep.subr.bf16.mxu0 0
    %213 = vmatpush1.bf16.msra.mxu0 0
    %214 = vmatprep.subr.bf16.mxu0 0
    %215 = vmatpush1.bf16.msra.mxu0 0
    %216 = vmatprep.subr.bf16.mxu0 0
    %217 = vmatpush1.bf16.msra.mxu0 0
    %218 = vmatprep.subr.bf16.mxu0 0
    %219 = vmatpush1.bf16.msra.mxu0 0
    %220 = vmatprep.subr.bf16.mxu0 0
    %221 = vmatpush1.bf16.msra.mxu0 0
    %222 = vmatprep.mubr.bf16.mxu0 0
    %223 = vmatmul.mubr.bf16.gmra.mrb[0].mxu0 %v145
    %v224 = vpop.f32.mrb[0].mxu0
    %v225 = vadd.f32 %v94, %v224
    %v226 = vpop.f32.mrb[0].mxu0
    %v227 = vadd.f32 %v98, %v226
    %v228 = vpop.f32.mrb[0].mxu0
    %v229 = vadd.f32 %v94, %v228
    %v230 = vpop.f32.mrb[0].mxu0
    %v231 = vadd.f32 %v98, %v230
    %232 = vdwg.mxu0
    %v233 = vmax.f32 %v182, 0.0
    %v234 = vmax.f32 %v184, 0.0
    %v235 = vmax.f32 %v225, 0.0
    %v236 = vmax.f32 %v227, 0.0
    %v237 = vmax.f32 %v186, 0.0
    %v238 = vmax.f32 %v188, 0.0
    %v239 = vmax.f32 %v229, 0.0
    %v240 = vmax.f32 %v231, 0.0
    %v241 = vpack.c.bf16 %v237, %v233
    %v242 = vpack.c.bf16 %v238, %v234
    %v243 = vpack.c.bf16 %v239, %v235
    %v244 = vpack.c.bf16 %v240, %v236
    %v245 = vld [vmem:[#allocation7] sm:$0xff]
    %v246 = vld [vmem:[#allocation7 + $0x8] sm:$0xff]
    %v247 = vld [vmem:[#allocation7 + $0x10] sm:$0xff]
    %v248 = vld [vmem:[#allocation7 + $0x18] sm:$0xff]
    %v249 = vld [vmem:[#allocation7 + $0x20] sm:$0xff]
    %v250 = vld [vmem:[#allocation7 + $0x28] sm:$0xff]
    %v251 = vld [vmem:[#allocation7 + $0x30] sm:$0xff]
    %v252 = vld [vmem:[#allocation7 + $0x38] sm:$0xff]
    %v253 = vld [vmem:[#allocation7 + $0x40] sm:$0xff]
    %v254 = vld [vmem:[#allocation7 + $0x48] sm:$0xff]
    %v255 = vld [vmem:[#allocation7 + $0x50] sm:$0xff]
    %v256 = vld [vmem:[#allocation7 + $0x58] sm:$0xff]
    %v257 = vld [vmem:[#allocation7 + $0x60] sm:$0xff]
    %v258 = vld [vmem:[#allocation7 + $0x68] sm:$0xff]
    %v259 = vld [vmem:[#allocation7 + $0x70] sm:$0xff]
    %v260 = vld [vmem:[#allocation7 + $0x78] sm:$0xff]
    %v261 = vld [vmem:[#allocation7 + $0x80] sm:$0xff]
    %v262 = vld [vmem:[#allocation7 + $0x88] sm:$0xff]
    %v263 = vld [vmem:[#allocation7 + $0x90] sm:$0xff]
    %v264 = vld [vmem:[#allocation7 + $0x98] sm:$0xff]
    %v265 = vld [vmem:[#allocation7 + $0xa0] sm:$0xff]
    %v266 = vld [vmem:[#allocation7 + $0xa8] sm:$0xff]
    %v267 = vld [vmem:[#allocation7 + $0xb0] sm:$0xff]
    %v268 = vld [vmem:[#allocation7 + $0xb8] sm:$0xff]
    %v269 = vld [vmem:[#allocation7 + $0xc0] sm:$0xff]
    %v270 = vld [vmem:[#allocation7 + $0xc8] sm:$0xff]
    %v271 = vld [vmem:[#allocation7 + $0xd0] sm:$0xff]
    %v272 = vld [vmem:[#allocation7 + $0xd8] sm:$0xff]
    %v273 = vld [vmem:[#allocation7 + $0xe0] sm:$0xff]
    %v274 = vld [vmem:[#allocation7 + $0xe8] sm:$0xff]
    %v275 = vld [vmem:[#allocation7 + $0xf0] sm:$0xff]
    %v276 = vld [vmem:[#allocation7 + $0xf8] sm:$0xff]
    %v277 = vld [vmem:[#allocation7 + $0x100] sm:$0xff]
    %v278 = vld [vmem:[#allocation7 + $0x108] sm:$0xff]
    %v279 = vld [vmem:[#allocation7 + $0x110] sm:$0xff]
    %v280 = vld [vmem:[#allocation7 + $0x118] sm:$0xff]
    %v281 = vld [vmem:[#allocation7 + $0x120] sm:$0xff]
    %v282 = vld [vmem:[#allocation7 + $0x128] sm:$0xff]
    %v283 = vld [vmem:[#allocation7 + $0x130] sm:$0xff]
    %v284 = vld [vmem:[#allocation7 + $0x138] sm:$0xff]
    %v285 = vld [vmem:[#allocation7 + $0x140] sm:$0xff]
    %v286 = vld [vmem:[#allocation7 + $0x148] sm:$0xff]
    %v287 = vld [vmem:[#allocation7 + $0x150] sm:$0xff]
    %v288 = vld [vmem:[#allocation7 + $0x158] sm:$0xff]
    %v289 = vld [vmem:[#allocation7 + $0x160] sm:$0xff]
    %v290 = vld [vmem:[#allocation7 + $0x168] sm:$0xff]
    %v291 = vld [vmem:[#allocation7 + $0x170] sm:$0xff]
    %v292 = vld [vmem:[#allocation7 + $0x178] sm:$0xff]
    %v293 = vld [vmem:[#allocation7 + $0x180] sm:$0xff]
    %v294 = vld [vmem:[#allocation7 + $0x188] sm:$0xff]
    %v295 = vld [vmem:[#allocation7 + $0x190] sm:$0xff]
    %v296 = vld [vmem:[#allocation7 + $0x198] sm:$0xff]
    %v297 = vld [vmem:[#allocation7 + $0x1a0] sm:$0xff]
    %v298 = vld [vmem:[#allocation7 + $0x1a8] sm:$0xff]
    %v299 = vld [vmem:[#allocation7 + $0x1b0] sm:$0xff]
    %v300 = vld [vmem:[#allocation7 + $0x1b8] sm:$0xff]
    %v301 = vld [vmem:[#allocation7 + $0x1c0] sm:$0xff]
    %v302 = vld [vmem:[#allocation7 + $0x1c8] sm:$0xff]
    %v303 = vld [vmem:[#allocation7 + $0x1d0] sm:$0xff]
    %v304 = vld [vmem:[#allocation7 + $0x1d8] sm:$0xff]
    %v305 = vld [vmem:[#allocation7 + $0x1e0] sm:$0xff]
    %v306 = vld [vmem:[#allocation7 + $0x1e8] sm:$0xff]
    %v307 = vld [vmem:[#allocation7 + $0x1f0] sm:$0xff]
    %v308 = vld [vmem:[#allocation7 + $0x1f8] sm:$0xff]
    %v309 = vld [vmem:[#allocation7 + $0x200] sm:$0xff]
    %v310 = vld [vmem:[#allocation7 + $0x208] sm:$0xff]
    %v311 = vld [vmem:[#allocation7 + $0x210] sm:$0xff]
    %v312 = vld [vmem:[#allocation7 + $0x218] sm:$0xff]
    %v313 = vld [vmem:[#allocation7 + $0x220] sm:$0xff]
    %v314 = vld [vmem:[#allocation7 + $0x228] sm:$0xff]
    %v315 = vld [vmem:[#allocation7 + $0x230] sm:$0xff]
    %v316 = vld [vmem:[#allocation7 + $0x238] sm:$0xff]
    %v317 = vld [vmem:[#allocation7 + $0x240] sm:$0xff]
    %v318 = vld [vmem:[#allocation7 + $0x248] sm:$0xff]
    %v319 = vld [vmem:[#allocation7 + $0x250] sm:$0xff]
    %v320 = vld [vmem:[#allocation7 + $0x258] sm:$0xff]
    %v321 = vld [vmem:[#allocation7 + $0x260] sm:$0xff]
    %v322 = vld [vmem:[#allocation7 + $0x268] sm:$0xff]
    %v323 = vld [vmem:[#allocation7 + $0x270] sm:$0xff]
    %v324 = vld [vmem:[#allocation7 + $0x278] sm:$0xff]
    %v325 = vld [vmem:[#allocation7 + $0x280] sm:$0xff]
    %v326 = vld [vmem:[#allocation7 + $0x288] sm:$0xff]
    %v327 = vld [vmem:[#allocation7 + $0x290] sm:$0xff]
    %v328 = vld [vmem:[#allocation7 + $0x298] sm:$0xff]
    %v329 = vld [vmem:[#allocation7 + $0x2a0] sm:$0xff]
    %v330 = vld [vmem:[#allocation7 + $0x2a8] sm:$0xff]
    %v331 = vld [vmem:[#allocation7 + $0x2b0] sm:$0xff]
    %v332 = vld [vmem:[#allocation7 + $0x2b8] sm:$0xff]
    %v333 = vld [vmem:[#allocation7 + $0x2c0] sm:$0xff]
    %v334 = vld [vmem:[#allocation7 + $0x2c8] sm:$0xff]
    %v335 = vld [vmem:[#allocation7 + $0x2d0] sm:$0xff]
    %v336 = vld [vmem:[#allocation7 + $0x2d8] sm:$0xff]
    %v337 = vld [vmem:[#allocation7 + $0x2e0] sm:$0xff]
    %v338 = vld [vmem:[#allocation7 + $0x2e8] sm:$0xff]
    %v339 = vld [vmem:[#allocation7 + $0x2f0] sm:$0xff]
    %v340 = vld [vmem:[#allocation7 + $0x2f8] sm:$0xff]
    %v341 = vld [vmem:[#allocation7 + $0x300] sm:$0xff]
    %v342 = vld [vmem:[#allocation7 + $0x308] sm:$0xff]
    %v343 = vld [vmem:[#allocation7 + $0x310] sm:$0xff]
    %v344 = vld [vmem:[#allocation7 + $0x318] sm:$0xff]
    %v345 = vld [vmem:[#allocation7 + $0x320] sm:$0xff]
    %v346 = vld [vmem:[#allocation7 + $0x328] sm:$0xff]
    %v347 = vld [vmem:[#allocation7 + $0x330] sm:$0xff]
    %v348 = vld [vmem:[#allocation7 + $0x338] sm:$0xff]
    %v349 = vld [vmem:[#allocation7 + $0x340] sm:$0xff]
    %v350 = vld [vmem:[#allocation7 + $0x348] sm:$0xff]
    %v351 = vld [vmem:[#allocation7 + $0x350] sm:$0xff]
    %v352 = vld [vmem:[#allocation7 + $0x358] sm:$0xff]
    %v353 = vld [vmem:[#allocation7 + $0x360] sm:$0xff]
    %v354 = vld [vmem:[#allocation7 + $0x368] sm:$0xff]
    %v355 = vld [vmem:[#allocation7 + $0x370] sm:$0xff]
    %v356 = vld [vmem:[#allocation7 + $0x378] sm:$0xff]
    %v357 = vld [vmem:[#allocation7 + $0x380] sm:$0xff]
    %v358 = vld [vmem:[#allocation7 + $0x388] sm:$0xff]
    %v359 = vld [vmem:[#allocation7 + $0x390] sm:$0xff]
    %v360 = vld [vmem:[#allocation7 + $0x398] sm:$0xff]
    %v361 = vld [vmem:[#allocation7 + $0x3a0] sm:$0xff]
    %v362 = vld [vmem:[#allocation7 + $0x3a8] sm:$0xff]
    %v363 = vld [vmem:[#allocation7 + $0x3b0] sm:$0xff]
    %v364 = vld [vmem:[#allocation7 + $0x3b8] sm:$0xff]
    %v365 = vld [vmem:[#allocation7 + $0x3c0] sm:$0xff]
    %v366 = vld [vmem:[#allocation7 + $0x3c8] sm:$0xff]
    %v367 = vld [vmem:[#allocation7 + $0x3d0] sm:$0xff]
    %v368 = vld [vmem:[#allocation7 + $0x3d8] sm:$0xff]
    %v369 = vld [vmem:[#allocation7 + $0x3e0] sm:$0xff]
    %v370 = vld [vmem:[#allocation7 + $0x3e8] sm:$0xff]
    %v371 = vld [vmem:[#allocation7 + $0x3f0] sm:$0xff]
    %v372 = vld [vmem:[#allocation7 + $0x3f8] sm:$0xff]
    %v373 = vld [vmem:[%s4] sm:$0xf]
    %v375 = vlaneseq
    %v376 = vshrl.u32 %v375, 7
    %v377 = vsub.s32 0, %v376
    %v378 = vrot.slane %v373, %v377
    %v379 = vlaneseq
    %v380 = vshrl.u32 %v379, 7
    %v381 = vsub.s32 1, %v380
    %v382 = vrot.slane %v373, %v381
    %v383 = vlaneseq
    %v384 = vshrl.u32 %v383, 7
    %v385 = vsub.s32 2, %v384
    %v386 = vrot.slane %v373, %v385
    %v387 = vlaneseq
    %v388 = vshrl.u32 %v387, 7
    %v389 = vsub.s32 3, %v388
    %v390 = vrot.slane %v373, %v389
    %v523 = vunpack.c.l.b16 %v245
    %v524 = vunpack.c.h.b16 %v245
    %v525 = vunpack.c.l.b16 %v246
    %v526 = vunpack.c.h.b16 %v246
    %v527 = vunpack.c.l.b16 %v247
    %v528 = vunpack.c.h.b16 %v247
    %v529 = vunpack.c.l.b16 %v248
    %v530 = vunpack.c.h.b16 %v248
    %v531 = vunpack.c.l.b16 %v249
    %v532 = vunpack.c.h.b16 %v249
    %v533 = vunpack.c.l.b16 %v250
    %v534 = vunpack.c.h.b16 %v250
    %v535 = vunpack.c.l.b16 %v251
    %v536 = vunpack.c.h.b16 %v251
    %v537 = vunpack.c.l.b16 %v252
    %v538 = vunpack.c.h.b16 %v252
    %v539 = vunpack.c.l.b16 %v253
    %v540 = vunpack.c.h.b16 %v253
    %v541 = vunpack.c.l.b16 %v254
    %v542 = vunpack.c.h.b16 %v254
    %v543 = vunpack.c.l.b16 %v255
    %v544 = vunpack.c.h.b16 %v255
    %v545 = vunpack.c.l.b16 %v256
    %v546 = vunpack.c.h.b16 %v256
    %v547 = vunpack.c.l.b16 %v257
    %v548 = vunpack.c.h.b16 %v257
    %v549 = vunpack.c.l.b16 %v258
    %v550 = vunpack.c.h.b16 %v258
    %v551 = vunpack.c.l.b16 %v259
    %v552 = vunpack.c.h.b16 %v259
    %v553 = vunpack.c.l.b16 %v260
    %v554 = vunpack.c.h.b16 %v260
    %v555 = vunpack.c.l.b16 %v261
    %v556 = vunpack.c.h.b16 %v261
    %v557 = vunpack.c.l.b16 %v262
    %v558 = vunpack.c.h.b16 %v262
    %v559 = vunpack.c.l.b16 %v263
    %v560 = vunpack.c.h.b16 %v263
    %v561 = vunpack.c.l.b16 %v264
    %v562 = vunpack.c.h.b16 %v264
    %v563 = vunpack.c.l.b16 %v265
    %v564 = vunpack.c.h.b16 %v265
    %v565 = vunpack.c.l.b16 %v266
    %v566 = vunpack.c.h.b16 %v266
    %v567 = vunpack.c.l.b16 %v267
    %v568 = vunpack.c.h.b16 %v267
    %v569 = vunpack.c.l.b16 %v268
    %v570 = vunpack.c.h.b16 %v268
    %v571 = vunpack.c.l.b16 %v269
    %v572 = vunpack.c.h.b16 %v269
    %v573 = vunpack.c.l.b16 %v270
    %v574 = vunpack.c.h.b16 %v270
    %v575 = vunpack.c.l.b16 %v271
    %v576 = vunpack.c.h.b16 %v271
    %v577 = vunpack.c.l.b16 %v272
    %v578 = vunpack.c.h.b16 %v272
    %v579 = vunpack.c.l.b16 %v273
    %v580 = vunpack.c.h.b16 %v273
    %v581 = vunpack.c.l.b16 %v274
    %v582 = vunpack.c.h.b16 %v274
    %v583 = vunpack.c.l.b16 %v275
    %v584 = vunpack.c.h.b16 %v275
    %v585 = vunpack.c.l.b16 %v276
    %v586 = vunpack.c.h.b16 %v276
    %v587 = vunpack.c.l.b16 %v277
    %v588 = vunpack.c.h.b16 %v277
    %v589 = vunpack.c.l.b16 %v278
    %v590 = vunpack.c.h.b16 %v278
    %v591 = vunpack.c.l.b16 %v279
    %v592 = vunpack.c.h.b16 %v279
    %v593 = vunpack.c.l.b16 %v280
    %v594 = vunpack.c.h.b16 %v280
    %v595 = vunpack.c.l.b16 %v281
    %v596 = vunpack.c.h.b16 %v281
    %v597 = vunpack.c.l.b16 %v282
    %v598 = vunpack.c.h.b16 %v282
    %v599 = vunpack.c.l.b16 %v283
    %v600 = vunpack.c.h.b16 %v283
    %v601 = vunpack.c.l.b16 %v284
    %v602 = vunpack.c.h.b16 %v284
    %v603 = vunpack.c.l.b16 %v285
    %v604 = vunpack.c.h.b16 %v285
    %v605 = vunpack.c.l.b16 %v286
    %v606 = vunpack.c.h.b16 %v286
    %v607 = vunpack.c.l.b16 %v287
    %v608 = vunpack.c.h.b16 %v287
    %v609 = vunpack.c.l.b16 %v288
    %v610 = vunpack.c.h.b16 %v288
    %v611 = vunpack.c.l.b16 %v289
    %v612 = vunpack.c.h.b16 %v289
    %v613 = vunpack.c.l.b16 %v290
    %v614 = vunpack.c.h.b16 %v290
    %v615 = vunpack.c.l.b16 %v291
    %v616 = vunpack.c.h.b16 %v291
    %v617 = vunpack.c.l.b16 %v292
    %v618 = vunpack.c.h.b16 %v292
    %v619 = vunpack.c.l.b16 %v293
    %v620 = vunpack.c.h.b16 %v293
    %v621 = vunpack.c.l.b16 %v294
    %v622 = vunpack.c.h.b16 %v294
    %v623 = vunpack.c.l.b16 %v295
    %v624 = vunpack.c.h.b16 %v295
    %v625 = vunpack.c.l.b16 %v296
    %v626 = vunpack.c.h.b16 %v296
    %v627 = vunpack.c.l.b16 %v297
    %v628 = vunpack.c.h.b16 %v297
    %v629 = vunpack.c.l.b16 %v298
    %v630 = vunpack.c.h.b16 %v298
    %v631 = vunpack.c.l.b16 %v299
    %v632 = vunpack.c.h.b16 %v299
    %v633 = vunpack.c.l.b16 %v300
    %v634 = vunpack.c.h.b16 %v300
    %v635 = vunpack.c.l.b16 %v301
    %v636 = vunpack.c.h.b16 %v301
    %v637 = vunpack.c.l.b16 %v302
    %v638 = vunpack.c.h.b16 %v302
    %v639 = vunpack.c.l.b16 %v303
    %v640 = vunpack.c.h.b16 %v303
    %v641 = vunpack.c.l.b16 %v304
    %v642 = vunpack.c.h.b16 %v304
    %v643 = vunpack.c.l.b16 %v305
    %v644 = vunpack.c.h.b16 %v305
    %v645 = vunpack.c.l.b16 %v306
    %v646 = vunpack.c.h.b16 %v306
    %v647 = vunpack.c.l.b16 %v307
    %v648 = vunpack.c.h.b16 %v307
    %v649 = vunpack.c.l.b16 %v308
    %v650 = vunpack.c.h.b16 %v308
    %v651 = vunpack.c.l.b16 %v309
    %v652 = vunpack.c.h.b16 %v309
    %v653 = vunpack.c.l.b16 %v310
    %v654 = vunpack.c.h.b16 %v310
    %v655 = vunpack.c.l.b16 %v311
    %v656 = vunpack.c.h.b16 %v311
    %v657 = vunpack.c.l.b16 %v312
    %v658 = vunpack.c.h.b16 %v312
    %v659 = vunpack.c.l.b16 %v313
    %v660 = vunpack.c.h.b16 %v313
    %v661 = vunpack.c.l.b16 %v314
    %v662 = vunpack.c.h.b16 %v314
    %v663 = vunpack.c.l.b16 %v315
    %v664 = vunpack.c.h.b16 %v315
    %v665 = vunpack.c.l.b16 %v316
    %v666 = vunpack.c.h.b16 %v316
    %v667 = vunpack.c.l.b16 %v317
    %v668 = vunpack.c.h.b16 %v317
    %v669 = vunpack.c.l.b16 %v318
    %v670 = vunpack.c.h.b16 %v318
    %v671 = vunpack.c.l.b16 %v319
    %v672 = vunpack.c.h.b16 %v319
    %v673 = vunpack.c.l.b16 %v320
    %v674 = vunpack.c.h.b16 %v320
    %v675 = vunpack.c.l.b16 %v321
    %v676 = vunpack.c.h.b16 %v321
    %v677 = vunpack.c.l.b16 %v322
    %v678 = vunpack.c.h.b16 %v322
    %v679 = vunpack.c.l.b16 %v323
    %v680 = vunpack.c.h.b16 %v323
    %v681 = vunpack.c.l.b16 %v324
    %v682 = vunpack.c.h.b16 %v324
    %v683 = vunpack.c.l.b16 %v325
    %v684 = vunpack.c.h.b16 %v325
    %v685 = vunpack.c.l.b16 %v326
    %v686 = vunpack.c.h.b16 %v326
    %v687 = vunpack.c.l.b16 %v327
    %v688 = vunpack.c.h.b16 %v327
    %v689 = vunpack.c.l.b16 %v328
    %v690 = vunpack.c.h.b16 %v328
    %v691 = vunpack.c.l.b16 %v329
    %v692 = vunpack.c.h.b16 %v329
    %v693 = vunpack.c.l.b16 %v330
    %v694 = vunpack.c.h.b16 %v330
    %v695 = vunpack.c.l.b16 %v331
    %v696 = vunpack.c.h.b16 %v331
    %v697 = vunpack.c.l.b16 %v332
    %v698 = vunpack.c.h.b16 %v332
    %v699 = vunpack.c.l.b16 %v333
    %v700 = vunpack.c.h.b16 %v333
    %v701 = vunpack.c.l.b16 %v334
    %v702 = vunpack.c.h.b16 %v334
    %v703 = vunpack.c.l.b16 %v335
    %v704 = vunpack.c.h.b16 %v335
    %v705 = vunpack.c.l.b16 %v336
    %v706 = vunpack.c.h.b16 %v336
    %v707 = vunpack.c.l.b16 %v337
    %v708 = vunpack.c.h.b16 %v337
    %v709 = vunpack.c.l.b16 %v338
    %v710 = vunpack.c.h.b16 %v338
    %v711 = vunpack.c.l.b16 %v339
    %v712 = vunpack.c.h.b16 %v339
    %v713 = vunpack.c.l.b16 %v340
    %v714 = vunpack.c.h.b16 %v340
    %v715 = vunpack.c.l.b16 %v341
    %v716 = vunpack.c.h.b16 %v341
    %v717 = vunpack.c.l.b16 %v342
    %v718 = vunpack.c.h.b16 %v342
    %v719 = vunpack.c.l.b16 %v343
    %v720 = vunpack.c.h.b16 %v343
    %v721 = vunpack.c.l.b16 %v344
    %v722 = vunpack.c.h.b16 %v344
    %v723 = vunpack.c.l.b16 %v345
    %v724 = vunpack.c.h.b16 %v345
    %v725 = vunpack.c.l.b16 %v346
    %v726 = vunpack.c.h.b16 %v346
    %v727 = vunpack.c.l.b16 %v347
    %v728 = vunpack.c.h.b16 %v347
    %v729 = vunpack.c.l.b16 %v348
    %v730 = vunpack.c.h.b16 %v348
    %v731 = vunpack.c.l.b16 %v349
    %v732 = vunpack.c.h.b16 %v349
    %v733 = vunpack.c.l.b16 %v350
    %v734 = vunpack.c.h.b16 %v350
    %v735 = vunpack.c.l.b16 %v351
    %v736 = vunpack.c.h.b16 %v351
    %v737 = vunpack.c.l.b16 %v352
    %v738 = vunpack.c.h.b16 %v352
    %v739 = vunpack.c.l.b16 %v353
    %v740 = vunpack.c.h.b16 %v353
    %v741 = vunpack.c.l.b16 %v354
    %v742 = vunpack.c.h.b16 %v354
    %v743 = vunpack.c.l.b16 %v355
    %v744 = vunpack.c.h.b16 %v355
    %v745 = vunpack.c.l.b16 %v356
    %v746 = vunpack.c.h.b16 %v356
    %v747 = vunpack.c.l.b16 %v357
    %v748 = vunpack.c.h.b16 %v357
    %v749 = vunpack.c.l.b16 %v358
    %v750 = vunpack.c.h.b16 %v358
    %v751 = vunpack.c.l.b16 %v359
    %v752 = vunpack.c.h.b16 %v359
    %v753 = vunpack.c.l.b16 %v360
    %v754 = vunpack.c.h.b16 %v360
    %v755 = vunpack.c.l.b16 %v361
    %v756 = vunpack.c.h.b16 %v361
    %v757 = vunpack.c.l.b16 %v362
    %v758 = vunpack.c.h.b16 %v362
    %v759 = vunpack.c.l.b16 %v363
    %v760 = vunpack.c.h.b16 %v363
    %v761 = vunpack.c.l.b16 %v364
    %v762 = vunpack.c.h.b16 %v364
    %v763 = vunpack.c.l.b16 %v365
    %v764 = vunpack.c.h.b16 %v365
    %v765 = vunpack.c.l.b16 %v366
    %v766 = vunpack.c.h.b16 %v366
    %v767 = vunpack.c.l.b16 %v367
    %v768 = vunpack.c.h.b16 %v367
    %v769 = vunpack.c.l.b16 %v368
    %v770 = vunpack.c.h.b16 %v368
    %v771 = vunpack.c.l.b16 %v369
    %v772 = vunpack.c.h.b16 %v369
    %v773 = vunpack.c.l.b16 %v370
    %v774 = vunpack.c.h.b16 %v370
    %v775 = vunpack.c.l.b16 %v371
    %v776 = vunpack.c.h.b16 %v371
    %v777 = vunpack.c.l.b16 %v372
    %v778 = vunpack.c.h.b16 %v372
    %v779 = vpack.c.b16 %v527, %v523
    %v780 = vpack.c.b16 %v528, %v524
    %v781 = vpack.c.b16 %v529, %v525
    %v782 = vpack.c.b16 %v530, %v526
    %v783 = vpack.c.b16 %v535, %v531
    %v784 = vpack.c.b16 %v536, %v532
    %v785 = vpack.c.b16 %v537, %v533
    %v786 = vpack.c.b16 %v538, %v534
    %v787 = vpack.c.b16 %v543, %v539
    %v788 = vpack.c.b16 %v544, %v540
    %v789 = vpack.c.b16 %v545, %v541
    %v790 = vpack.c.b16 %v546, %v542
    %v791 = vpack.c.b16 %v551, %v547
    %v792 = vpack.c.b16 %v552, %v548
    %v793 = vpack.c.b16 %v553, %v549
    %v794 = vpack.c.b16 %v554, %v550
    %v795 = vpack.c.b16 %v559, %v555
    %v796 = vpack.c.b16 %v560, %v556
    %v797 = vpack.c.b16 %v561, %v557
    %v798 = vpack.c.b16 %v562, %v558
    %v799 = vpack.c.b16 %v567, %v563
    %v800 = vpack.c.b16 %v568, %v564
    %v801 = vpack.c.b16 %v569, %v565
    %v802 = vpack.c.b16 %v570, %v566
    %v803 = vpack.c.b16 %v575, %v571
    %v804 = vpack.c.b16 %v576, %v572
    %v805 = vpack.c.b16 %v577, %v573
    %v806 = vpack.c.b16 %v578, %v574
    %v807 = vpack.c.b16 %v583, %v579
    %v808 = vpack.c.b16 %v584, %v580
    %v809 = vpack.c.b16 %v585, %v581
    %v810 = vpack.c.b16 %v586, %v582
    %v811 = vpack.c.b16 %v591, %v587
    %v812 = vpack.c.b16 %v592, %v588
    %v813 = vpack.c.b16 %v593, %v589
    %v814 = vpack.c.b16 %v594, %v590
    %v815 = vpack.c.b16 %v599, %v595
    %v816 = vpack.c.b16 %v600, %v596
    %v817 = vpack.c.b16 %v601, %v597
    %v818 = vpack.c.b16 %v602, %v598
    %v819 = vpack.c.b16 %v607, %v603
    %v820 = vpack.c.b16 %v608, %v604
    %v821 = vpack.c.b16 %v609, %v605
    %v822 = vpack.c.b16 %v610, %v606
    %v823 = vpack.c.b16 %v615, %v611
    %v824 = vpack.c.b16 %v616, %v612
    %v825 = vpack.c.b16 %v617, %v613
    %v826 = vpack.c.b16 %v618, %v614
    %v827 = vpack.c.b16 %v623, %v619
    %v828 = vpack.c.b16 %v624, %v620
    %v829 = vpack.c.b16 %v625, %v621
    %v830 = vpack.c.b16 %v626, %v622
    %v831 = vpack.c.b16 %v631, %v627
    %v832 = vpack.c.b16 %v632, %v628
    %v833 = vpack.c.b16 %v633, %v629
    %v834 = vpack.c.b16 %v634, %v630
    %v835 = vpack.c.b16 %v639, %v635
    %v836 = vpack.c.b16 %v640, %v636
    %v837 = vpack.c.b16 %v641, %v637
    %v838 = vpack.c.b16 %v642, %v638
    %v839 = vpack.c.b16 %v647, %v643
    %v840 = vpack.c.b16 %v648, %v644
    %v841 = vpack.c.b16 %v649, %v645
    %v842 = vpack.c.b16 %v650, %v646
    %v843 = vpack.c.b16 %v655, %v651
    %v844 = vpack.c.b16 %v656, %v652
    %v845 = vpack.c.b16 %v657, %v653
    %v846 = vpack.c.b16 %v658, %v654
    %v847 = vpack.c.b16 %v663, %v659
    %v848 = vpack.c.b16 %v664, %v660
    %v849 = vpack.c.b16 %v665, %v661
    %v850 = vpack.c.b16 %v666, %v662
    %v851 = vpack.c.b16 %v671, %v667
    %v852 = vpack.c.b16 %v672, %v668
    %v853 = vpack.c.b16 %v673, %v669
    %v854 = vpack.c.b16 %v674, %v670
    %v855 = vpack.c.b16 %v679, %v675
    %v856 = vpack.c.b16 %v680, %v676
    %v857 = vpack.c.b16 %v681, %v677
    %v858 = vpack.c.b16 %v682, %v678
    %v859 = vpack.c.b16 %v687, %v683
    %v860 = vpack.c.b16 %v688, %v684
    %v861 = vpack.c.b16 %v689, %v685
    %v862 = vpack.c.b16 %v690, %v686
    %v863 = vpack.c.b16 %v695, %v691
    %v864 = vpack.c.b16 %v696, %v692
    %v865 = vpack.c.b16 %v697, %v693
    %v866 = vpack.c.b16 %v698, %v694
    %v867 = vpack.c.b16 %v703, %v699
    %v868 = vpack.c.b16 %v704, %v700
    %v869 = vpack.c.b16 %v705, %v701
    %v870 = vpack.c.b16 %v706, %v702
    %v871 = vpack.c.b16 %v711, %v707
    %v872 = vpack.c.b16 %v712, %v708
    %v873 = vpack.c.b16 %v713, %v709
    %v874 = vpack.c.b16 %v714, %v710
    %v875 = vpack.c.b16 %v719, %v715
    %v876 = vpack.c.b16 %v720, %v716
    %v877 = vpack.c.b16 %v721, %v717
    %v878 = vpack.c.b16 %v722, %v718
    %v879 = vpack.c.b16 %v727, %v723
    %v880 = vpack.c.b16 %v728, %v724
    %v881 = vpack.c.b16 %v729, %v725
    %v882 = vpack.c.b16 %v730, %v726
    %v883 = vpack.c.b16 %v735, %v731
    %v884 = vpack.c.b16 %v736, %v732
    %v885 = vpack.c.b16 %v737, %v733
    %v886 = vpack.c.b16 %v738, %v734
    %v887 = vpack.c.b16 %v743, %v739
    %v888 = vpack.c.b16 %v744, %v740
    %v889 = vpack.c.b16 %v745, %v741
    %v890 = vpack.c.b16 %v746, %v742
    %v891 = vpack.c.b16 %v751, %v747
    %v892 = vpack.c.b16 %v752, %v748
    %v893 = vpack.c.b16 %v753, %v749
    %v894 = vpack.c.b16 %v754, %v750
    %v895 = vpack.c.b16 %v759, %v755
    %v896 = vpack.c.b16 %v760, %v756
    %v897 = vpack.c.b16 %v761, %v757
    %v898 = vpack.c.b16 %v762, %v758
    %v899 = vpack.c.b16 %v767, %v763
    %v900 = vpack.c.b16 %v768, %v764
    %v901 = vpack.c.b16 %v769, %v765
    %v902 = vpack.c.b16 %v770, %v766
    %v903 = vpack.c.b16 %v775, %v771
    %v904 = vpack.c.b16 %v776, %v772
    %v905 = vpack.c.b16 %v777, %v773
    %v906 = vpack.c.b16 %v778, %v774
    %1035 = vmatprep.subr.bf16.mxu0 %v780
    %1036 = vmatpush1.bf16.msra.mxu0 %v779
    %1037 = vmatprep.subr.bf16.mxu0 %v784
    %1038 = vmatpush1.bf16.msra.mxu0 %v783
    %1039 = vmatprep.subr.bf16.mxu0 %v788
    %1040 = vmatpush1.bf16.msra.mxu0 %v787
    %1041 = vmatprep.subr.bf16.mxu0 %v792
    %1042 = vmatpush1.bf16.msra.mxu0 %v791
    %1043 = vmatprep.subr.bf16.mxu0 %v796
    %1044 = vmatpush1.bf16.msra.mxu0 %v795
    %1045 = vmatprep.subr.bf16.mxu0 %v800
    %1046 = vmatpush1.bf16.msra.mxu0 %v799
    %1047 = vmatprep.subr.bf16.mxu0 %v804
    %1048 = vmatpush1.bf16.msra.mxu0 %v803
    %1049 = vmatprep.subr.bf16.mxu0 %v808
    %1050 = vmatpush1.bf16.msra.mxu0 %v807
    %1051 = vmatprep.subr.bf16.mxu0 %v812
    %1052 = vmatpush1.bf16.msra.mxu0 %v811
    %1053 = vmatprep.subr.bf16.mxu0 %v816
    %1054 = vmatpush1.bf16.msra.mxu0 %v815
    %1055 = vmatprep.subr.bf16.mxu0 %v820
    %1056 = vmatpush1.bf16.msra.mxu0 %v819
    %1057 = vmatprep.subr.bf16.mxu0 %v824
    %1058 = vmatpush1.bf16.msra.mxu0 %v823
    %1059 = vmatprep.subr.bf16.mxu0 %v828
    %1060 = vmatpush1.bf16.msra.mxu0 %v827
    %1061 = vmatprep.subr.bf16.mxu0 %v832
    %1062 = vmatpush1.bf16.msra.mxu0 %v831
    %1063 = vmatprep.subr.bf16.mxu0 %v836
    %1064 = vmatpush1.bf16.msra.mxu0 %v835
    %1065 = vmatprep.subr.bf16.mxu0 %v840
    %1066 = vmatpush1.bf16.msra.mxu0 %v839
    %1067 = vmatprep.mubr.bf16.mxu0 %v242
    %1068 = vmatmul.mubr.bf16.gmra.mrb[0].mxu0 %v241
    %v1069 = vpop.f32.mrb[0].mxu0
    %v1070 = vadd.f32 %v378, %v1069
    %v1071 = vpop.f32.mrb[0].mxu0
    %v1072 = vadd.f32 %v382, %v1071
    %v1073 = vpop.f32.mrb[0].mxu0
    %v1074 = vadd.f32 %v378, %v1073
    %v1075 = vpop.f32.mrb[0].mxu0
    %v1076 = vadd.f32 %v382, %v1075
    %1077 = vdwg.mxu0
    %1078 = vmatprep.subr.bf16.mxu0 %v844
    %1079 = vmatpush1.bf16.msra.mxu0 %v843
    %1080 = vmatprep.subr.bf16.mxu0 %v848
    %1081 = vmatpush1.bf16.msra.mxu0 %v847
    %1082 = vmatprep.subr.bf16.mxu0 %v852
    %1083 = vmatpush1.bf16.msra.mxu0 %v851
    %1084 = vmatprep.subr.bf16.mxu0 %v856
    %1085 = vmatpush1.bf16.msra.mxu0 %v855
    %1086 = vmatprep.subr.bf16.mxu0 %v860
    %1087 = vmatpush1.bf16.msra.mxu0 %v859
    %1088 = vmatprep.subr.bf16.mxu0 %v864
    %1089 = vmatpush1.bf16.msra.mxu0 %v863
    %1090 = vmatprep.subr.bf16.mxu0 %v868
    %1091 = vmatpush1.bf16.msra.mxu0 %v867
    %1092 = vmatprep.subr.bf16.mxu0 %v872
    %1093 = vmatpush1.bf16.msra.mxu0 %v871
    %1094 = vmatprep.subr.bf16.mxu0 %v876
    %1095 = vmatpush1.bf16.msra.mxu0 %v875
    %1096 = vmatprep.subr.bf16.mxu0 %v880
    %1097 = vmatpush1.bf16.msra.mxu0 %v879
    %1098 = vmatprep.subr.bf16.mxu0 %v884
    %1099 = vmatpush1.bf16.msra.mxu0 %v883
    %1100 = vmatprep.subr.bf16.mxu0 %v888
    %1101 = vmatpush1.bf16.msra.mxu0 %v887
    %1102 = vmatprep.subr.bf16.mxu0 %v892
    %1103 = vmatpush1.bf16.msra.mxu0 %v891
    %1104 = vmatprep.subr.bf16.mxu0 %v896
    %1105 = vmatpush1.bf16.msra.mxu0 %v895
    %1106 = vmatprep.subr.bf16.mxu0 %v900
    %1107 = vmatpush1.bf16.msra.mxu0 %v899
    %1108 = vmatprep.subr.bf16.mxu0 %v904
    %1109 = vmatpush1.bf16.msra.mxu0 %v903
    %1110 = vmatprep.mubr.bf16.mxu0 %v244
    %1111 = vmatmul.mubr.bf16.gmra.mrb[0].mxu0 %v243
    %v1112 = vpop.f32.mrb[0].mxu0
    %v1113 = vadd.f32 %v1070, %v1112
    %v1114 = vpop.f32.mrb[0].mxu0
    %v1115 = vadd.f32 %v1072, %v1114
    %v1116 = vpop.f32.mrb[0].mxu0
    %v1117 = vadd.f32 %v1074, %v1116
    %v1118 = vpop.f32.mrb[0].mxu0
    %v1119 = vadd.f32 %v1076, %v1118
    %1120 = vdwg.mxu0
    %1121 = vmatprep.subr.bf16.mxu0 %v782
    %1122 = vmatpush1.bf16.msra.mxu0 %v781
    %1123 = vmatprep.subr.bf16.mxu0 %v786
    %1124 = vmatpush1.bf16.msra.mxu0 %v785
    %1125 = vmatprep.subr.bf16.mxu0 %v790
    %1126 = vmatpush1.bf16.msra.mxu0 %v789
    %1127 = vmatprep.subr.bf16.mxu0 %v794
    %1128 = vmatpush1.bf16.msra.mxu0 %v793
    %1129 = vmatprep.subr.bf16.mxu0 %v798
    %1130 = vmatpush1.bf16.msra.mxu0 %v797
    %1131 = vmatprep.subr.bf16.mxu0 %v802
    %1132 = vmatpush1.bf16.msra.mxu0 %v801
    %1133 = vmatprep.subr.bf16.mxu0 %v806
    %1134 = vmatpush1.bf16.msra.mxu0 %v805
    %1135 = vmatprep.subr.bf16.mxu0 %v810
    %1136 = vmatpush1.bf16.msra.mxu0 %v809
    %1137 = vmatprep.subr.bf16.mxu0 %v814
    %1138 = vmatpush1.bf16.msra.mxu0 %v813
    %1139 = vmatprep.subr.bf16.mxu0 %v818
    %1140 = vmatpush1.bf16.msra.mxu0 %v817
    %1141 = vmatprep.subr.bf16.mxu0 %v822
    %1142 = vmatpush1.bf16.msra.mxu0 %v821
    %1143 = vmatprep.subr.bf16.mxu0 %v826
    %1144 = vmatpush1.bf16.msra.mxu0 %v825
    %1145 = vmatprep.subr.bf16.mxu0 %v830
    %1146 = vmatpush1.bf16.msra.mxu0 %v829
    %1147 = vmatprep.subr.bf16.mxu0 %v834
    %1148 = vmatpush1.bf16.msra.mxu0 %v833
    %1149 = vmatprep.subr.bf16.mxu0 %v838
    %1150 = vmatpush1.bf16.msra.mxu0 %v837
    %1151 = vmatprep.subr.bf16.mxu0 %v842
    %1152 = vmatpush1.bf16.msra.mxu0 %v841
    %1153 = vmatprep.mubr.bf16.mxu0 %v242
    %1154 = vmatmul.mubr.bf16.gmra.mrb[0].mxu0 %v241
    %v1155 = vpop.f32.mrb[0].mxu0
    %v1156 = vadd.f32 %v386, %v1155
    %v1157 = vpop.f32.mrb[0].mxu0
    %v1158 = vadd.f32 %v390, %v1157
    %v1159 = vpop.f32.mrb[0].mxu0
    %v1160 = vadd.f32 %v386, %v1159
    %v1161 = vpop.f32.mrb[0].mxu0
    %v1162 = vadd.f32 %v390, %v1161
    %1163 = vdwg.mxu0
    %1164 = vmatprep.subr.bf16.mxu0 %v846
    %1165 = vmatpush1.bf16.msra.mxu0 %v845
    %1166 = vmatprep.subr.bf16.mxu0 %v850
    %1167 = vmatpush1.bf16.msra.mxu0 %v849
    %1168 = vmatprep.subr.bf16.mxu0 %v854
    %1169 = vmatpush1.bf16.msra.mxu0 %v853
    %1170 = vmatprep.subr.bf16.mxu0 %v858
    %1171 = vmatpush1.bf16.msra.mxu0 %v857
    %1172 = vmatprep.subr.bf16.mxu0 %v862
    %1173 = vmatpush1.bf16.msra.mxu0 %v861
    %1174 = vmatprep.subr.bf16.mxu0 %v866
    %1175 = vmatpush1.bf16.msra.mxu0 %v865
    %1176 = vmatprep.subr.bf16.mxu0 %v870
    %1177 = vmatpush1.bf16.msra.mxu0 %v869
    %1178 = vmatprep.subr.bf16.mxu0 %v874
    %1179 = vmatpush1.bf16.msra.mxu0 %v873
    %1180 = vmatprep.subr.bf16.mxu0 %v878
    %1181 = vmatpush1.bf16.msra.mxu0 %v877
    %1182 = vmatprep.subr.bf16.mxu0 %v882
    %1183 = vmatpush1.bf16.msra.mxu0 %v881
    %1184 = vmatprep.subr.bf16.mxu0 %v886
    %1185 = vmatpush1.bf16.msra.mxu0 %v885
    %1186 = vmatprep.subr.bf16.mxu0 %v890
    %1187 = vmatpush1.bf16.msra.mxu0 %v889
    %1188 = vmatprep.subr.bf16.mxu0 %v894
    %1189 = vmatpush1.bf16.msra.mxu0 %v893
    %1190 = vmatprep.subr.bf16.mxu0 %v898
    %1191 = vmatpush1.bf16.msra.mxu0 %v897
    %1192 = vmatprep.subr.bf16.mxu0 %v902
    %1193 = vmatpush1.bf16.msra.mxu0 %v901
    %1194 = vmatprep.subr.bf16.mxu0 %v906
    %1195 = vmatpush1.bf16.msra.mxu0 %v905
    %1196 = vmatprep.mubr.bf16.mxu0 %v244
    %1197 = vmatmul.mubr.bf16.gmra.mrb[0].mxu0 %v243
    %v1198 = vpop.f32.mrb[0].mxu0
    %v1199 = vadd.f32 %v1156, %v1198
    %v1200 = vpop.f32.mrb[0].mxu0
    %v1201 = vadd.f32 %v1158, %v1200
    %v1202 = vpop.f32.mrb[0].mxu0
    %v1203 = vadd.f32 %v1160, %v1202
    %v1204 = vpop.f32.mrb[0].mxu0
    %v1205 = vadd.f32 %v1162, %v1204
    %1206 = vdwg.mxu0
    %v1207 = vmax.f32 %v1113, 0.0
    %v1208 = vmax.f32 %v1115, 0.0
    %v1209 = vmax.f32 %v1199, 0.0
    %v1210 = vmax.f32 %v1201, 0.0
    %v1211 = vmax.f32 %v1117, 0.0
    %v1212 = vmax.f32 %v1119, 0.0
    %v1213 = vmax.f32 %v1203, 0.0
    %v1214 = vmax.f32 %v1205, 0.0
    %v1215 = vld [vmem:[%s5] sm:$0xf]
    %v1217 = vlaneseq
    %v1218 = vshrl.u32 %v1217, 7
    %v1219 = vsub.s32 0, %v1218
    %v1220 = vrot.slane %v1215, %v1219
    %v1221 = vlaneseq
    %v1222 = vshrl.u32 %v1221, 7
    %v1223 = vsub.s32 1, %v1222
    %v1224 = vrot.slane %v1215, %v1223
    %v1225 = vlaneseq
    %v1226 = vshrl.u32 %v1225, 7
    %v1227 = vsub.s32 2, %v1226
    %v1228 = vrot.slane %v1215, %v1227
    %v1229 = vlaneseq
    %v1230 = vshrl.u32 %v1229, 7
    %v1231 = vsub.s32 3, %v1230
    %v1232 = vrot.slane %v1215, %v1231
    %v1237 = vmul.f32 %v1207, %v1220
    %v1238 = vmul.f32 %v1208, %v1224
    %v1239 = vmul.f32 %v1209, %v1228
    %v1240 = vmul.f32 %v1210, %v1232
    %v1241 = vmul.f32 %v1211, %v1220
    %v1242 = vmul.f32 %v1212, %v1224
    %v1243 = vmul.f32 %v1213, %v1228
    %v1244 = vmul.f32 %v1214, %v1232
    %v1245 = vadd.f32 %v1237, %v1238
    %v1246 = vadd.f32 %v1245, %v1239
    %v1247 = vadd.f32 %v1246, %v1240
    %1248 = vadd.xlane.f32.xlu0 %v1247
    %v1249 = vpop.xlane.xlu0 %1248
    %v1250 = vadd.f32 %v1241, %v1242
    %v1251 = vadd.f32 %v1250, %v1243
    %v1252 = vadd.f32 %v1251, %v1244
    %1253 = vadd.xlane.f32.xlu0 %v1252
    %v1254 = vpop.xlane.xlu0 %1253
    %v1255 = vld [vmem:[#allocation2] sm:$0x1]
    %v1257 = vlaneseq
    %v1258 = vshrl.u32 %v1257, 7
    %v1259 = vsub.s32 0, %v1258
    %v1260 = vrot.slane %v1255, %v1259
    %v1262 = vadd.f32 %v1249, %v1260
    %v1263 = vadd.f32 %v1254, %v1260
    %vm1264 = vcmask 7168
    %1265 = vst.msk [vmem:[%s7] sm:$0xff] %vm1264, %v1262
    %1266 = vst.msk [vmem:[%s7 + $0x8] sm:$0xff] %vm1264, %v1263
    // Predicated region
    $region42: #{tpu_custom_call.1} parent=1 // pred_check
      _
    $region43: #{tpu_custom_call.1} parent=1 // pred_check_branch
      %1268 = sbr.rel (0) target = $region45
    $region44: #{tpu_custom_call.1} parent=1 // pred_region
      _
    $region45: #{tpu_custom_call.1} parent=1 // pred_fallthru
      _
    // Predicated region
    $region46: #{tpu_custom_call.1} parent=1 // pred_check
      _
    $region47: #{tpu_custom_call.1} parent=1 // pred_check_branch
      %1270 = sbr.rel (0) target = $region49
    $region48: #{tpu_custom_call.1} parent=1 // pred_region
      _
    $region49: #{tpu_custom_call.1} parent=1 // pred_fallthru
      _
    %1271 = vsyncpa [#allocation4], 1
    %1272 = vsyncpa [#allocation6], 1

</llo_original>
